<compile_context>
chip_gen: v7x
topology: tpu7x:2x2x1
jax: 0.10.0
libtpu: 0.0.40
codegen_flags: <defaults>
</compile_context>

<pallas_src>
import jax
import jax.numpy as jnp
from jax import lax
from jax.experimental import pallas as pl
from jax.experimental.pallas import tpu as pltpu

# ----------------------- configuration (module defaults) ---------------------
IN_CHANNELS = 4
CHANNELS = 4
KERNEL_SIZE = 3
PADDING = 1
RADIX = 2
GROUPS = 1                                      # cardinality
REDUCTION_FACTOR = 4
INTER = max(IN_CHANNELS * RADIX // REDUCTION_FACTOR, 32)    # 32
COUT = CHANNELS * RADIX                         # 8
CONV_GROUPS = GROUPS * RADIX                    # 2
CIN_PG = IN_CHANNELS // CONV_GROUPS             # in-channels per conv group  (2)
COUT_PG = COUT // CONV_GROUPS                   # out-channels per conv group (4)

B, H, W = 2, 16, 16
HW = H * W                                      # 256 -> lane-dense last dim
NTAP = KERNEL_SIZE * KERNEL_SIZE                # 9
NXROW = B * IN_CHANNELS                         # 8   packed input rows  (b*Cin+ci)
NYROW = B * COUT                                # 16  packed conv-out rows (r*8+b*4+c)
NOROW = B * CHANNELS                            # 8   packed output rows (b*4+c)

LPAD = 128                                      # lane-aligned flat zero pad
XPW = HW + 2 * LPAD                             # 512
KTAPS = NTAP * NXROW                            # 72  real im2col rows
KDIM = 128                                      # padded contraction dim (MXU)

FCW = INTER + 1                                 # 33: fc weight lanes + bias lane
FC1_W0, FC1_B = 0, CHANNELS                     # fcp rows 0..3 / row 4
FC2_R0 = CHANNELS + 1                           # fcp rows 5..8  (radix split 0)
FC2_R1 = FC2_R0 + CHANNELS                      # fcp rows 9..12 (radix split 1)
FCP_ROWS, FCP_COLS = 16, 128

assert GROUPS == 1 and RADIX == 2, "kernel specialised for module defaults"
assert HW % 128 == 0, "flattened spatial extent must be lane-tile aligned"
assert LPAD >= W + PADDING, "flat pad must cover a full row shift"
assert KTAPS + 8 <= KDIM


# ------------------------------ fused kernel ---------------------------------
def isa_fused_kernel(x_ref, wfull_ref, fcp_ref, out_ref, xpad_ref, taps_ref):
    # x_ref    : (NXROW, HW)        packed input, row = b*IN_CHANNELS + cin
    # wfull_ref: (NYROW, KDIM)      block-diag im2col conv weight; col 72 = bias
    # fcp_ref  : (FCP_ROWS, FCP_COLS) packed fc1/fc2 weights with folded biases
    # out_ref  : (NOROW, HW)        row = b*CHANNELS + c
    # xpad_ref : (NXROW, XPW)       VMEM scratch, lane-aligned zero-padded input
    # taps_ref : (KDIM, HW)         VMEM scratch, im2col tap matrix

    # ---- lane-aligned zero pad of the flattened input (full-lane stores) ----
    xpad_ref[:, 0:LPAD] = jnp.zeros((NXROW, LPAD), jnp.float32)
    xpad_ref[:, LPAD + HW:XPW] = jnp.zeros((NXROW, LPAD), jnp.float32)
    xpad_ref[:, LPAD:LPAD + HW] = x_ref[...]

    # ---- column boundary masks (row boundaries are handled by the zero pad) -
    col = lax.broadcasted_iota(jnp.int32, (NXROW, HW), 1) % W
    not_left = col != 0
    not_right = col != (W - 1)

    # ---- build the im2col tap matrix (9 shifted taps, aligned stores) -------
    for kh in range(KERNEL_SIZE):
        for kw in range(KERNEL_SIZE):
            t = kh * KERNEL_SIZE + kw
            start = LPAD + (kh - 1) * W + (kw - 1)
            xs = xpad_ref[:, start:start + HW]          # (NXROW, HW) shifted tap
            if kw == 0:
                xs = jnp.where(not_left, xs, 0.0)
            elif kw == KERNEL_SIZE - 1:
                xs = jnp.where(not_right, xs, 0.0)
            taps_ref[t * NXROW:(t + 1) * NXROW, :] = xs
    # ones rows fold the conv bias (wfull col 72 = bias, cols 73.. are zero)
    taps_ref[KTAPS:KTAPS + NXROW, :] = jnp.ones((NXROW, HW), jnp.float32)
    taps_ref[KTAPS + NXROW:KDIM, :] = jnp.zeros((KDIM - KTAPS - NXROW, HW),
                                                jnp.float32)

    # ---- grouped 3x3 conv + bias on the MXU: (16,128) @ (128,256) -----------
    y = jnp.dot(wfull_ref[...], taps_ref[...],
                preferred_element_type=jnp.float32)       # (NYROW, HW)
    y = jnp.maximum(y, 0.0)                               # ReLU
    y0 = y[0:NOROW, :]                                    # radix split 0 (b*4+c)
    y1 = y[NOROW:NYROW, :]                                # radix split 1 (b*4+c)

    # ---- radix split-sum + global average pool (lane-dense reduce) ----------
    gap = jnp.sum(y0 + y1, axis=1, keepdims=True) * (1.0 / HW)   # (NOROW, 1)

    # ---- fc1 -> ReLU -> fc2 -> rSoftMax over radix (tiny per-sample math) ---
    w1m = fcp_ref[FC1_W0:FC1_W0 + CHANNELS, 0:FCW]        # (4, 33) fc1 weight
    w1a = fcp_ref[FC1_B:FC1_B + 1, 0:FCW]                 # (1, 33) fc1 bias (+1 lane)
    w2b0 = fcp_ref[FC2_R0:FC2_R0 + CHANNELS, 0:FCW]       # (4, 33) fc2 r=0 | bias
    w2b1 = fcp_ref[FC2_R1:FC2_R1 + CHANNELS, 0:FCW]       # (4, 33) fc2 r=1 | bias

    att0_parts = []
    att1_parts = []
    for b in range(B):
        gap_b = gap[b * CHANNELS:(b + 1) * CHANNELS, :]                 # (4, 1)
        h1 = jnp.maximum(
            jnp.sum(gap_b * w1m, axis=0, keepdims=True) + w1a, 0.0)     # (1, 33)
        # lane 32 of h1 is exactly 1.0 -> folds fc2 bias into the reduction.
        a0 = jnp.sum(w2b0 * h1, axis=1, keepdims=True)                  # (4, 1)
        a1 = jnp.sum(w2b1 * h1, axis=1, keepdims=True)                  # (4, 1)
        m = jnp.maximum(a0, a1)
        e0 = jnp.exp(a0 - m)
        e1 = jnp.exp(a1 - m)
        inv = 1.0 / (e0 + e1)
        att0_parts.append(e0 * inv)
        att1_parts.append(e1 * inv)

    att0 = jnp.concatenate(att0_parts, axis=0)            # (NOROW, 1)
    att1 = jnp.concatenate(att1_parts, axis=0)            # (NOROW, 1)

    # ---- attention-weighted sum (single lane-dense (8,256) store) -----------
    out_ref[...] = att0 * y0 + att1 * y1


# ------------------------------ wrapper --------------------------------------
def isa_forward(x, p):
    b_, cin_, h_, w_ = x.shape
    assert (b_, cin_, h_, w_) == (B, IN_CHANNELS, H, W)

    x_packed = x.reshape(B * IN_CHANNELS, HW)             # contiguous, free

    # ---- block-diag im2col conv weight (16, 128); conv bias folded in col 72
    w5 = p["w_conv"].reshape(RADIX, CHANNELS, CIN_PG, KERNEL_SIZE, KERNEL_SIZE)
    w_rct = jnp.transpose(w5, (0, 1, 3, 4, 2)).reshape(
        RADIX, CHANNELS, NTAP, CIN_PG)                    # [r, c, t, ci]
    w_rctc = jnp.zeros((RADIX, CHANNELS, NTAP, IN_CHANNELS), jnp.float32)
    w_rctc = w_rctc.at[0, :, :, 0:CIN_PG].set(w_rct[0])
    w_rctc = w_rctc.at[1, :, :, CIN_PG:2 * CIN_PG].set(w_rct[1])
    eye_b = jnp.eye(B, dtype=jnp.float32)
    wfull = (w_rctc[:, None, :, :, None, :] *
             eye_b[None, :, None, None, :, None])          # [r,b,c,t,b',cin]
    wfull = wfull.reshape(NYROW, KTAPS)                    # (16, 72)
    bias_col = jnp.broadcast_to(p["b_conv"].reshape(RADIX, 1, CHANNELS),
                                (RADIX, B, CHANNELS)).reshape(NYROW, 1)
    wfull = jnp.concatenate(
        [wfull, bias_col,
         jnp.zeros((NYROW, KDIM - KTAPS - 1), jnp.float32)], axis=1)   # (16, 128)

    # ---- packed fc parameters (16, 128), biases folded ----------------------
    w1t = p["w1"].reshape(INTER, CHANNELS).T               # (4, 32): [c, j]
    b1 = p["b1"].reshape(INTER)
    w2 = p["w2"].reshape(RADIX, CHANNELS, INTER)           # [r, c, j]
    b2 = p["b2"].reshape(RADIX, CHANNELS)
    fcp = jnp.zeros((FCP_ROWS, FCP_COLS), jnp.float32)
    fcp = fcp.at[FC1_W0:FC1_W0 + CHANNELS, 0:INTER].set(w1t)
    fcp = fcp.at[FC1_B, 0:INTER].set(b1)
    fcp = fcp.at[FC1_B, INTER].set(1.0)                    # bias-fold lane for fc2
    fcp = fcp.at[FC2_R0:FC2_R0 + CHANNELS, 0:INTER].set(w2[0])
    fcp = fcp.at[FC2_R0:FC2_R0 + CHANNELS, INTER].set(b2[0])
    fcp = fcp.at[FC2_R1:FC2_R1 + CHANNELS, 0:INTER].set(w2[1])
    fcp = fcp.at[FC2_R1:FC2_R1 + CHANNELS, INTER].set(b2[1])

    out_flat = pl.pallas_call(
        isa_fused_kernel,
        out_shape=jax.ShapeDtypeStruct((NOROW, HW), jnp.float32),
        grid=(1,),
        in_specs=[
            pl.BlockSpec((NXROW, HW), lambda i: (0, 0)),
            pl.BlockSpec((NYROW, KDIM), lambda i: (0, 0)),
            pl.BlockSpec((FCP_ROWS, FCP_COLS), lambda i: (0, 0)),
        ],
        out_specs=pl.BlockSpec((NOROW, HW), lambda i: (0, 0)),
        scratch_shapes=[
            pltpu.VMEM((NXROW, XPW), jnp.float32),
            pltpu.VMEM((KDIM, HW), jnp.float32),
        ],
        compiler_params=pltpu.CompilerParams(
            dimension_semantics=("arbitrary",)),
    )(x_packed, wfull, fcp)

    return out_flat.reshape(B, CHANNELS, H, W)


# ------------------------ pure-JAX reference ---------------------------------
def reference(x, p):
    y = lax.conv_general_dilated(
        x, p["w_conv"], window_strides=(1, 1),
        padding=((PADDING, PADDING), (PADDING, PADDING)),
        feature_group_count=CONV_GROUPS,
        dimension_numbers=("NCHW", "OIHW", "NCHW"))
    y = jnp.maximum(y + p["b_conv"][None, :, None, None], 0.0)
    splits = [y[:, r * CHANNELS:(r + 1) * CHANNELS] for r in range(RADIX)]
    gap = splits[0]
    for sp in splits[1:]:
        gap = gap + sp
    gap = jnp.mean(gap, axis=(2, 3))                                  # (B, channels)
    h = jnp.maximum(gap @ p["w1"].reshape(INTER, CHANNELS).T + p["b1"], 0.0)
    a = h @ p["w2"].reshape(COUT, INTER).T + p["b2"]                  # (B, Cout)
    a4 = a.reshape(B, GROUPS, RADIX, -1)
    a4 = jnp.swapaxes(a4, 1, 2)
    a4 = jax.nn.softmax(a4, axis=1)
    att = a4.reshape(B, -1)
    attens = [att[:, r * CHANNELS:(r + 1) * CHANNELS] for r in range(RADIX)]
    out = jnp.zeros_like(splits[0])
    for at, sp in zip(attens, splits):
        out = out + at[:, :, None, None] * sp
    return out


if __name__ == "__main__":
    key = jax.random.PRNGKey(0)
    ks = jax.random.split(key, 7)
    x = jax.random.normal(ks[0], (B, IN_CHANNELS, H, W), jnp.float32)
    params = {
        "w_conv": 0.1 * jax.random.normal(
            ks[1], (COUT, CIN_PG, KERNEL_SIZE, KERNEL_SIZE), jnp.float32),
        "b_conv": 0.1 * jax.random.normal(ks[2], (COUT,), jnp.float32),
        "w1":     0.1 * jax.random.normal(ks[3], (INTER, CHANNELS, 1, 1), jnp.float32),
        "b1":     0.1 * jax.random.normal(ks[4], (INTER,), jnp.float32),
        "w2":     0.1 * jax.random.normal(ks[5], (COUT, INTER, 1, 1), jnp.float32),
        "b2":     0.1 * jax.random.normal(ks[6], (COUT,), jnp.float32),
    }

    out = jax.jit(isa_forward)(x, params)
    out = jax.block_until_ready(out)

    ref = reference(x, params)
    assert out.shape == (B, CHANNELS, H, W)
    assert jnp.allclose(out, ref, atol=1e-4, rtol=1e-4), (
        f"mismatch: max abs err = {jnp.max(jnp.abs(out - ref))}")
    print("KERNEL_OK")
</pallas_src>

<mosaic_0001>
module attributes {stable_mosaic.version = 11 : i64} {
  func.func @isa_fused_kernel(%arg0: i32, %arg1: memref<8x256xf32, #tpu.memory_space<vmem>>, %arg2: memref<16x128xf32, #tpu.memory_space<vmem>>, %arg3: memref<16x128xf32, #tpu.memory_space<vmem>>, %arg4: memref<8x256xf32, #tpu.memory_space<vmem>>, %arg5: memref<8x512xf32, #tpu.memory_space<vmem>>, %arg6: memref<128x256xf32, #tpu.memory_space<vmem>>) attributes {dimension_semantics = [#tpu.dimension_semantics<arbitrary>], iteration_bounds = array<i64: 1>, scalar_prefetch = 0 : i64, scratch_operands = 2 : i64, tpu.core_type = #tpu.core_type<tc>, window_params = [{pipeline_mode = #tpu.pipeline_mode<synchronous>, transform_indices = @transform_0, window_bounds = array<i64: 8, 256>}, {pipeline_mode = #tpu.pipeline_mode<synchronous>, transform_indices = @transform_1, window_bounds = array<i64: 16, 128>}, {pipeline_mode = #tpu.pipeline_mode<synchronous>, transform_indices = @transform_2, window_bounds = array<i64: 16, 128>}, {pipeline_mode = #tpu.pipeline_mode<synchronous>, transform_indices = @transform_3, window_bounds = array<i64: 8, 256>}]} {
    %cst = arith.constant 0.000000e+00 : f32
    %0 = vector.broadcast %cst : f32 to vector<8x128xf32>
    %c0 = arith.constant 0 : index
    %c0_0 = arith.constant 0 : index
    %1 = vector.load %arg5[%c0, %c0_0] : memref<8x512xf32, #tpu.memory_space<vmem>>, vector<8x128xf32>
    tpu.vector_store %arg5[%c0, %c0_0], %0 {strides = array<i32>} : memref<8x512xf32, #tpu.memory_space<vmem>>, vector<8x128xf32>,
    %cst_1 = arith.constant 0.000000e+00 : f32
    %2 = vector.broadcast %cst_1 : f32 to vector<8x128xf32>
    %c0_2 = arith.constant 0 : index
    %c384 = arith.constant 384 : index
    %3 = vector.load %arg5[%c0_2, %c384] : memref<8x512xf32, #tpu.memory_space<vmem>>, vector<8x128xf32>
    tpu.vector_store %arg5[%c0_2, %c384], %2 {strides = array<i32>} : memref<8x512xf32, #tpu.memory_space<vmem>>, vector<8x128xf32>,
    %c0_3 = arith.constant 0 : index
    %c0_4 = arith.constant 0 : index
    %4 = vector.load %arg1[%c0_3, %c0_4] : memref<8x256xf32, #tpu.memory_space<vmem>>, vector<8x256xf32>
    %c0_5 = arith.constant 0 : index
    %c128 = arith.constant 128 : index
    %5 = vector.load %arg5[%c0_5, %c128] : memref<8x512xf32, #tpu.memory_space<vmem>>, vector<8x256xf32>
    tpu.vector_store %arg5[%c0_5, %c128], %4 {strides = array<i32>} : memref<8x512xf32, #tpu.memory_space<vmem>>, vector<8x256xf32>,
    %6 = tpu.iota {dimensions = array<i32: 1>} : vector<8x256xi32>
    %c16_i32 = arith.constant 16 : i32
    %c0_i32 = arith.constant 0 : i32
    %7 = arith.cmpi eq, %c16_i32, %c0_i32 : i32
    %c1_i32 = arith.constant 1 : i32
    %8 = arith.select %7, %c1_i32, %c16_i32 : i32
    %9 = vector.broadcast %8 : i32 to vector<8x256xi32>
    %10 = arith.remsi %6, %9 : vector<8x256xi32>
    %c0_i32_6 = arith.constant 0 : i32
    %11 = vector.broadcast %c0_i32_6 : i32 to vector<8x256xi32>
    %12 = arith.cmpi ne, %10, %11 : vector<8x256xi32>
    %c0_i32_7 = arith.constant 0 : i32
    %13 = vector.broadcast %c0_i32_7 : i32 to vector<8x256xi32>
    %14 = arith.cmpi slt, %10, %13 : vector<8x256xi32>
    %c0_i32_8 = arith.constant 0 : i32
    %15 = arith.cmpi slt, %8, %c0_i32_8 : i32
    %16 = vector.broadcast %15 : i1 to vector<8x256xi1>
    %17 = vector.broadcast %16 : vector<8x256xi1> to vector<8x256xi1>
    %18 = arith.xori %14, %17 : vector<8x256xi1>
    %19 = arith.andi %18, %12 : vector<8x256xi1>
    %20 = vector.broadcast %8 : i32 to vector<8x256xi32>
    %21 = arith.addi %10, %20 : vector<8x256xi32>
    %22 = arith.select %19, %21, %10 : vector<8x256xi1>, vector<8x256xi32>
    %c0_i32_9 = arith.constant 0 : i32
    %23 = vector.broadcast %c0_i32_9 : i32 to vector<8x256xi32>
    %24 = arith.cmpi ne, %22, %23 : vector<8x256xi32>
    %c15_i32 = arith.constant 15 : i32
    %25 = vector.broadcast %c15_i32 : i32 to vector<8x256xi32>
    %26 = arith.cmpi ne, %22, %25 : vector<8x256xi32>
    %c0_10 = arith.constant 0 : index
    %c111 = arith.constant 111 : index
    %27 = vector.load %arg5[%c0_10, %c111] : memref<8x512xf32, #tpu.memory_space<vmem>>, vector<8x256xf32>
    %cst_11 = arith.constant 0.000000e+00 : f32
    %28 = vector.broadcast %cst_11 : f32 to vector<8x256xf32>
    %29 = arith.select %24, %27, %28 : vector<8x256xi1>, vector<8x256xf32>
    %c0_12 = arith.constant 0 : index
    %c0_13 = arith.constant 0 : index
    %30 = vector.load %arg6[%c0_12, %c0_13] : memref<128x256xf32, #tpu.memory_space<vmem>>, vector<8x256xf32>
    tpu.vector_store %arg6[%c0_12, %c0_13], %29 {strides = array<i32>} : memref<128x256xf32, #tpu.memory_space<vmem>>, vector<8x256xf32>,
    %c0_14 = arith.constant 0 : index
    %c112 = arith.constant 112 : index
    %31 = vector.load %arg5[%c0_14, %c112] : memref<8x512xf32, #tpu.memory_space<vmem>>, vector<8x256xf32>
    %c8 = arith.constant 8 : index
    %c0_15 = arith.constant 0 : index
    %32 = vector.load %arg6[%c8, %c0_15] : memref<128x256xf32, #tpu.memory_space<vmem>>, vector<8x256xf32>
    tpu.vector_store %arg6[%c8, %c0_15], %31 {strides = array<i32>} : memref<128x256xf32, #tpu.memory_space<vmem>>, vector<8x256xf32>,
    %c0_16 = arith.constant 0 : index
    %c113 = arith.constant 113 : index
    %33 = vector.load %arg5[%c0_16, %c113] : memref<8x512xf32, #tpu.memory_space<vmem>>, vector<8x256xf32>
    %cst_17 = arith.constant 0.000000e+00 : f32
    %34 = vector.broadcast %cst_17 : f32 to vector<8x256xf32>
    %35 = arith.select %26, %33, %34 : vector<8x256xi1>, vector<8x256xf32>
    %c16 = arith.constant 16 : index
    %c0_18 = arith.constant 0 : index
    %36 = vector.load %arg6[%c16, %c0_18] : memref<128x256xf32, #tpu.memory_space<vmem>>, vector<8x256xf32>
    tpu.vector_store %arg6[%c16, %c0_18], %35 {strides = array<i32>} : memref<128x256xf32, #tpu.memory_space<vmem>>, vector<8x256xf32>,
    %c0_19 = arith.constant 0 : index
    %c127 = arith.constant 127 : index
    %37 = vector.load %arg5[%c0_19, %c127] : memref<8x512xf32, #tpu.memory_space<vmem>>, vector<8x256xf32>
    %cst_20 = arith.constant 0.000000e+00 : f32
    %38 = vector.broadcast %cst_20 : f32 to vector<8x256xf32>
    %39 = arith.select %24, %37, %38 : vector<8x256xi1>, vector<8x256xf32>
    %c24 = arith.constant 24 : index
    %c0_21 = arith.constant 0 : index
    %40 = vector.load %arg6[%c24, %c0_21] : memref<128x256xf32, #tpu.memory_space<vmem>>, vector<8x256xf32>
    tpu.vector_store %arg6[%c24, %c0_21], %39 {strides = array<i32>} : memref<128x256xf32, #tpu.memory_space<vmem>>, vector<8x256xf32>,
    %c0_22 = arith.constant 0 : index
    %c128_23 = arith.constant 128 : index
    %41 = vector.load %arg5[%c0_22, %c128_23] : memref<8x512xf32, #tpu.memory_space<vmem>>, vector<8x256xf32>
    %c32 = arith.constant 32 : index
    %c0_24 = arith.constant 0 : index
    %42 = vector.load %arg6[%c32, %c0_24] : memref<128x256xf32, #tpu.memory_space<vmem>>, vector<8x256xf32>
    tpu.vector_store %arg6[%c32, %c0_24], %41 {strides = array<i32>} : memref<128x256xf32, #tpu.memory_space<vmem>>, vector<8x256xf32>,
    %c0_25 = arith.constant 0 : index
    %c129 = arith.constant 129 : index
    %43 = vector.load %arg5[%c0_25, %c129] : memref<8x512xf32, #tpu.memory_space<vmem>>, vector<8x256xf32>
    %cst_26 = arith.constant 0.000000e+00 : f32
    %44 = vector.broadcast %cst_26 : f32 to vector<8x256xf32>
    %45 = arith.select %26, %43, %44 : vector<8x256xi1>, vector<8x256xf32>
    %c40 = arith.constant 40 : index
    %c0_27 = arith.constant 0 : index
    %46 = vector.load %arg6[%c40, %c0_27] : memref<128x256xf32, #tpu.memory_space<vmem>>, vector<8x256xf32>
    tpu.vector_store %arg6[%c40, %c0_27], %45 {strides = array<i32>} : memref<128x256xf32, #tpu.memory_space<vmem>>, vector<8x256xf32>,
    %c0_28 = arith.constant 0 : index
    %c143 = arith.constant 143 : index
    %47 = vector.load %arg5[%c0_28, %c143] : memref<8x512xf32, #tpu.memory_space<vmem>>, vector<8x256xf32>
    %cst_29 = arith.constant 0.000000e+00 : f32
    %48 = vector.broadcast %cst_29 : f32 to vector<8x256xf32>
    %49 = arith.select %24, %47, %48 : vector<8x256xi1>, vector<8x256xf32>
    %c48 = arith.constant 48 : index
    %c0_30 = arith.constant 0 : index
    %50 = vector.load %arg6[%c48, %c0_30] : memref<128x256xf32, #tpu.memory_space<vmem>>, vector<8x256xf32>
    tpu.vector_store %arg6[%c48, %c0_30], %49 {strides = array<i32>} : memref<128x256xf32, #tpu.memory_space<vmem>>, vector<8x256xf32>,
    %c0_31 = arith.constant 0 : index
    %c144 = arith.constant 144 : index
    %51 = vector.load %arg5[%c0_31, %c144] : memref<8x512xf32, #tpu.memory_space<vmem>>, vector<8x256xf32>
    %c56 = arith.constant 56 : index
    %c0_32 = arith.constant 0 : index
    %52 = vector.load %arg6[%c56, %c0_32] : memref<128x256xf32, #tpu.memory_space<vmem>>, vector<8x256xf32>
    tpu.vector_store %arg6[%c56, %c0_32], %51 {strides = array<i32>} : memref<128x256xf32, #tpu.memory_space<vmem>>, vector<8x256xf32>,
    %c0_33 = arith.constant 0 : index
    %c145 = arith.constant 145 : index
    %53 = vector.load %arg5[%c0_33, %c145] : memref<8x512xf32, #tpu.memory_space<vmem>>, vector<8x256xf32>
    %cst_34 = arith.constant 0.000000e+00 : f32
    %54 = vector.broadcast %cst_34 : f32 to vector<8x256xf32>
    %55 = arith.select %26, %53, %54 : vector<8x256xi1>, vector<8x256xf32>
    %c64 = arith.constant 64 : index
    %c0_35 = arith.constant 0 : index
    %56 = vector.load %arg6[%c64, %c0_35] : memref<128x256xf32, #tpu.memory_space<vmem>>, vector<8x256xf32>
    tpu.vector_store %arg6[%c64, %c0_35], %55 {strides = array<i32>} : memref<128x256xf32, #tpu.memory_space<vmem>>, vector<8x256xf32>,
    %cst_36 = arith.constant 1.000000e+00 : f32
    %57 = vector.broadcast %cst_36 : f32 to vector<8x256xf32>
    %c72 = arith.constant 72 : index
    %c0_37 = arith.constant 0 : index
    %58 = vector.load %arg6[%c72, %c0_37] : memref<128x256xf32, #tpu.memory_space<vmem>>, vector<8x256xf32>
    tpu.vector_store %arg6[%c72, %c0_37], %57 {strides = array<i32>} : memref<128x256xf32, #tpu.memory_space<vmem>>, vector<8x256xf32>,
    %cst_38 = arith.constant 0.000000e+00 : f32
    %59 = vector.broadcast %cst_38 : f32 to vector<48x256xf32>
    %c80 = arith.constant 80 : index
    %c0_39 = arith.constant 0 : index
    %60 = vector.load %arg6[%c80, %c0_39] : memref<128x256xf32, #tpu.memory_space<vmem>>, vector<48x256xf32>
    tpu.vector_store %arg6[%c80, %c0_39], %59 {strides = array<i32>} : memref<128x256xf32, #tpu.memory_space<vmem>>, vector<48x256xf32>,
    %c0_40 = arith.constant 0 : index
    %c0_41 = arith.constant 0 : index
    %61 = vector.load %arg2[%c0_40, %c0_41] : memref<16x128xf32, #tpu.memory_space<vmem>>, vector<16x128xf32>
    %c0_42 = arith.constant 0 : index
    %c0_43 = arith.constant 0 : index
    %62 = vector.load %arg6[%c0_42, %c0_43] : memref<128x256xf32, #tpu.memory_space<vmem>>, vector<128x256xf32>
    %cst_44 = arith.constant dense<0.000000e+00> : vector<16x256xf32>
    %63 = tpu.matmul %61, %62, %cst_44 {dimension_numbers = #tpu.dot_dimension_numbers<[1], [0], [0], [1], [0, 0, 1, 1], [], []>} : vector<16x128xf32>, vector<128x256xf32>, vector<16x256xf32> -> vector<16x256xf32>
    %cst_45 = arith.constant 0.000000e+00 : f32
    %64 = vector.broadcast %cst_45 : f32 to vector<16x256xf32>
    %65 = arith.maximumf %63, %64 : vector<16x256xf32>
    %66 = vector.extract_strided_slice %65 {offsets = [0, 0], sizes = [8, 256], strides = [1, 1]} : vector<16x256xf32> to vector<8x256xf32>
    %67 = vector.extract_strided_slice %65 {offsets = [8, 0], sizes = [8, 256], strides = [1, 1]} : vector<16x256xf32> to vector<8x256xf32>
    %68 = arith.addf %66, %67 : vector<8x256xf32>
    %cst_46 = arith.constant dense<0.000000e+00> : vector<8xf32>
    %69 = vector.multi_reduction <add>, %68, %cst_46 [1] : vector<8x256xf32> to vector<8xf32>
    %70 = vector.shape_cast %69 : vector<8xf32> to vector<8x1xf32>
    %cst_47 = arith.constant 3.906250e-03 : f32
    %71 = vector.broadcast %cst_47 : f32 to vector<8x1xf32>
    %72 = arith.mulf %70, %71 : vector<8x1xf32>
    %c0_48 = arith.constant 0 : index
    %c0_49 = arith.constant 0 : index
    %73 = vector.load %arg3[%c0_48, %c0_49] : memref<16x128xf32, #tpu.memory_space<vmem>>, vector<4x33xf32>
    %c4 = arith.constant 4 : index
    %c0_50 = arith.constant 0 : index
    %74 = vector.load %arg3[%c4, %c0_50] : memref<16x128xf32, #tpu.memory_space<vmem>>, vector<1x33xf32>
    %c5 = arith.constant 5 : index
    %c0_51 = arith.constant 0 : index
    %75 = vector.load %arg3[%c5, %c0_51] : memref<16x128xf32, #tpu.memory_space<vmem>>, vector<4x33xf32>
    %c9 = arith.constant 9 : index
    %c0_52 = arith.constant 0 : index
    %76 = vector.load %arg3[%c9, %c0_52] : memref<16x128xf32, #tpu.memory_space<vmem>>, vector<4x33xf32>
    %77 = vector.extract_strided_slice %72 {offsets = [0, 0], sizes = [4, 1], strides = [1, 1]} : vector<8x1xf32> to vector<4x1xf32>
    %78 = vector.broadcast %77 : vector<4x1xf32> to vector<4x33xf32>
    %79 = arith.mulf %78, %73 : vector<4x33xf32>
    %cst_53 = arith.constant dense<0.000000e+00> : vector<33xf32>
    %80 = vector.multi_reduction <add>, %79, %cst_53 [0] : vector<4x33xf32> to vector<33xf32>
    %81 = vector.shape_cast %80 : vector<33xf32> to vector<1x33xf32>
    %82 = arith.addf %81, %74 : vector<1x33xf32>
    %cst_54 = arith.constant 0.000000e+00 : f32
    %83 = vector.broadcast %cst_54 : f32 to vector<1x33xf32>
    %84 = arith.maximumf %82, %83 : vector<1x33xf32>
    %85 = vector.broadcast %84 : vector<1x33xf32> to vector<4x33xf32>
    %86 = arith.mulf %75, %85 : vector<4x33xf32>
    %cst_55 = arith.constant dense<0.000000e+00> : vector<4xf32>
    %87 = vector.multi_reduction <add>, %86, %cst_55 [1] : vector<4x33xf32> to vector<4xf32>
    %88 = vector.shape_cast %87 : vector<4xf32> to vector<4x1xf32>
    %89 = vector.broadcast %84 : vector<1x33xf32> to vector<4x33xf32>
    %90 = arith.mulf %76, %89 : vector<4x33xf32>
    %cst_56 = arith.constant dense<0.000000e+00> : vector<4xf32>
    %91 = vector.multi_reduction <add>, %90, %cst_56 [1] : vector<4x33xf32> to vector<4xf32>
    %92 = vector.shape_cast %91 : vector<4xf32> to vector<4x1xf32>
    %93 = arith.maximumf %88, %92 : vector<4x1xf32>
    %94 = arith.subf %88, %93 : vector<4x1xf32>
    %95 = math.exp %94 : vector<4x1xf32>
    %96 = arith.subf %92, %93 : vector<4x1xf32>
    %97 = math.exp %96 : vector<4x1xf32>
    %98 = arith.addf %95, %97 : vector<4x1xf32>
    %cst_57 = arith.constant 1.000000e+00 : f32
    %99 = vector.broadcast %cst_57 : f32 to vector<4x1xf32>
    %100 = arith.divf %99, %98 : vector<4x1xf32>
    %101 = arith.mulf %95, %100 : vector<4x1xf32>
    %102 = arith.mulf %97, %100 : vector<4x1xf32>
    %103 = vector.extract_strided_slice %72 {offsets = [4, 0], sizes = [4, 1], strides = [1, 1]} : vector<8x1xf32> to vector<4x1xf32>
    %104 = vector.broadcast %103 : vector<4x1xf32> to vector<4x33xf32>
    %105 = arith.mulf %104, %73 : vector<4x33xf32>
    %cst_58 = arith.constant dense<0.000000e+00> : vector<33xf32>
    %106 = vector.multi_reduction <add>, %105, %cst_58 [0] : vector<4x33xf32> to vector<33xf32>
    %107 = vector.shape_cast %106 : vector<33xf32> to vector<1x33xf32>
    %108 = arith.addf %107, %74 : vector<1x33xf32>
    %cst_59 = arith.constant 0.000000e+00 : f32
    %109 = vector.broadcast %cst_59 : f32 to vector<1x33xf32>
    %110 = arith.maximumf %108, %109 : vector<1x33xf32>
    %111 = vector.broadcast %110 : vector<1x33xf32> to vector<4x33xf32>
    %112 = arith.mulf %75, %111 : vector<4x33xf32>
    %cst_60 = arith.constant dense<0.000000e+00> : vector<4xf32>
    %113 = vector.multi_reduction <add>, %112, %cst_60 [1] : vector<4x33xf32> to vector<4xf32>
    %114 = vector.shape_cast %113 : vector<4xf32> to vector<4x1xf32>
    %115 = vector.broadcast %110 : vector<1x33xf32> to vector<4x33xf32>
    %116 = arith.mulf %76, %115 : vector<4x33xf32>
    %cst_61 = arith.constant dense<0.000000e+00> : vector<4xf32>
    %117 = vector.multi_reduction <add>, %116, %cst_61 [1] : vector<4x33xf32> to vector<4xf32>
    %118 = vector.shape_cast %117 : vector<4xf32> to vector<4x1xf32>
    %119 = arith.maximumf %114, %118 : vector<4x1xf32>
    %120 = arith.subf %114, %119 : vector<4x1xf32>
    %121 = math.exp %120 : vector<4x1xf32>
    %122 = arith.subf %118, %119 : vector<4x1xf32>
    %123 = math.exp %122 : vector<4x1xf32>
    %124 = arith.addf %121, %123 : vector<4x1xf32>
    %cst_62 = arith.constant 1.000000e+00 : f32
    %125 = vector.broadcast %cst_62 : f32 to vector<4x1xf32>
    %126 = arith.divf %125, %124 : vector<4x1xf32>
    %127 = arith.mulf %121, %126 : vector<4x1xf32>
    %128 = arith.mulf %123, %126 : vector<4x1xf32>
    %129 = tpu.concatenate %101, %127 in 0 : vector<4x1xf32>, vector<4x1xf32> -> vector<8x1xf32>
    %130 = tpu.concatenate %102, %128 in 0 : vector<4x1xf32>, vector<4x1xf32> -> vector<8x1xf32>
    %131 = vector.broadcast %129 : vector<8x1xf32> to vector<8x256xf32>
    %132 = arith.mulf %131, %66 : vector<8x256xf32>
    %133 = vector.broadcast %130 : vector<8x1xf32> to vector<8x256xf32>
    %134 = arith.mulf %133, %67 : vector<8x256xf32>
    %135 = arith.addf %132, %134 : vector<8x256xf32>
    %c0_63 = arith.constant 0 : index
    %c0_64 = arith.constant 0 : index
    %136 = vector.load %arg4[%c0_63, %c0_64] : memref<8x256xf32, #tpu.memory_space<vmem>>, vector<8x256xf32>
    tpu.vector_store %arg4[%c0_63, %c0_64], %135 {strides = array<i32>} : memref<8x256xf32, #tpu.memory_space<vmem>>, vector<8x256xf32>,
    return
  }
  func.func @transform_0(%arg0: i32) -> (i32, i32) {
    %c0_i32 = arith.constant 0 : i32
    %c0_i32_0 = arith.constant 0 : i32
    %c0_i32_1 = arith.constant 0 : i32
    return %c0_i32, %c0_i32_0 : i32, i32
  }
  func.func @transform_1(%arg0: i32) -> (i32, i32) {
    %c0_i32 = arith.constant 0 : i32
    %c0_i32_0 = arith.constant 0 : i32
    %c0_i32_1 = arith.constant 0 : i32
    return %c0_i32, %c0_i32_0 : i32, i32
  }
  func.func @transform_2(%arg0: i32) -> (i32, i32) {
    %c0_i32 = arith.constant 0 : i32
    %c0_i32_0 = arith.constant 0 : i32
    %c0_i32_1 = arith.constant 0 : i32
    return %c0_i32, %c0_i32_0 : i32, i32
  }
  func.func @transform_3(%arg0: i32) -> (i32, i32) {
    %c0_i32 = arith.constant 0 : i32
    %c0_i32_0 = arith.constant 0 : i32
    %c0_i32_1 = arith.constant 0 : i32
    return %c0_i32, %c0_i32_0 : i32, i32
  }
}

</mosaic_0001>

<llo_original>
// kernel: isa_forward.1
$region0: #{isa_forward.1}
  #allocation0 [shape = 'u32[]', space=smem, size = 0x4, offset = 0x4, fixed_abs, tag = 'smem constant byte address 0x4 - core index']
  #allocation1 [shape = 'u32[144,128]{1,0:T(1,128)}', space=vmem, size = 0x12000, scoped, tag = 'internal scratch']
  #allocation2 [shape = 'f32[8,512]{1,0:T(8,128)}', space=vmem, size = 0x4000, scoped, tag = 'scratch operand']
  #allocation3 [shape = 'f32[128,256]{1,0:T(8,128)}', space=vmem, size = 0x20000, scoped, tag = 'scratch operand']
  %s0 = inlined_call_operand.vmem [shape: f32[8,256], index: 0, kind: input, shape index: {}]
  %s1 = inlined_call_operand.vmem [shape: f32[16,128], index: 1, kind: input, shape index: {}]
  %s2 = inlined_call_operand.vmem [shape: f32[16,128], index: 2, kind: input, shape index: {}]
  %s3 = inlined_call_operand.vmem [shape: f32[8,256], index: 3, kind: output, shape index: {}]
  %s4 = sld [smem:[#allocation0]]
  $region22: #{isa_forward.1} parent=0
    _
  %s6 = ssub.s32 1, %s4
  %s7 = scalar_select 0, %s6, %s4
  // Predicated region
  $region2: #{isa_forward.1} parent=0 // pred_check
    _
  $region3: #{isa_forward.1} parent=0 // pred_check_branch
    %9 = sbr.rel (0) target = $region5
  $region4: #{isa_forward.1} parent=0 // pred_region
    _
  $region5: #{isa_forward.1} parent=0 // pred_fallthru
    _
  // Predicated region
  $region6: #{isa_forward.1} parent=0 // pred_check
    _
  $region7: #{isa_forward.1} parent=0 // pred_check_branch
    %11 = sbr.rel (0) target = $region9
  $region8: #{isa_forward.1} parent=0 // pred_region
    _
  $region9: #{isa_forward.1} parent=0 // pred_fallthru
    _
  // Predicated region
  $region10: #{isa_forward.1} parent=0 // pred_check
    _
  $region11: #{isa_forward.1} parent=0 // pred_check_branch
    %13 = sbr.rel (0) target = $region13
  $region12: #{isa_forward.1} parent=0 // pred_region
    _
  $region13: #{isa_forward.1} parent=0 // pred_fallthru
    _
  %14 = vst [vmem:[#allocation2] sm:$0xff] 0.0
  %15 = vst [vmem:[#allocation2 + $0x18] sm:$0xff] 0.0
  %v16 = vld [vmem:[%s0] sm:$0xff]
  %v17 = vld [vmem:[%s0 + $0x8] sm:$0xff]
  %18 = vst [vmem:[#allocation2 + $0x8] sm:$0xff] %v16
  %19 = vst [vmem:[#allocation2 + $0x10] sm:$0xff] %v17
  %v20 = vlaneseq
  %v21 = vand.u32 %v20, 127
  %v22 = vadd.s32 %v21, 128
  %vm23 = vcmp.lt.s32.totalorder %v21, 0
  %v24 = vsub.s32 0, %v21
  %v25 = vsel %vm23, %v24, %v21
  %v26 = vshrl.u32 %v25, 4
  %v27 = vand.u32 %v25, 15
  %v28 = vsub.s32 0, %v27
  %v29 = vsel %vm23, %v28, %v27
  %vm30 = vcmp.lt.s32.totalorder %v22, 0
  %v31 = vsub.s32 0, %v22
  %v32 = vsel %vm30, %v31, %v22
  %v33 = vshrl.u32 %v32, 4
  %v34 = vand.u32 %v32, 15
  %v35 = vsub.s32 0, %v34
  %v36 = vsel %vm30, %v35, %v34
  %vm37 = vcmp.ne.s32.totalorder %v29, 0
  %vm38 = vcmp.ne.s32.totalorder %v36, 0
  %vm39 = vcmp.lt.s32.totalorder %v29, 0
  %vm40 = vcmp.lt.s32.totalorder %v36, 0
  %vm41 = vmand %vm39, %vm37
  %vm42 = vmand %vm40, %vm38
  %v43 = vadd.s32 %v29, 16
  %v44 = vadd.s32 %v36, 16
  %v45 = vsel %vm41, %v43, %v29
  %v46 = vsel %vm42, %v44, %v36
  %vm47 = vcmp.ne.s32.totalorder %v45, 0
  %vm48 = vcmp.ne.s32.totalorder %v46, 0
  %vm49 = vcmp.ne.s32.totalorder %v45, 15
  %vm50 = vcmp.ne.s32.totalorder %v46, 15
  %v51 = vld [vmem:[#allocation2] sm:$0xff]
  %v52 = vld [vmem:[#allocation2 + $0x8] sm:$0xff]
  %v53 = vld [vmem:[#allocation2 + $0x10] sm:$0xff]
  %57 = vrot.lane.b32.xlu0 %v51, 17
  %v58 = vpop.permute.xlu0 %57
  %59 = vrot.lane.b32.xlu0 %v52, 17
  %v60 = vpop.permute.xlu0 %59
  %61 = vrot.lane.b32.xlu0 %v53, 17
  %v62 = vpop.permute.xlu0 %61
  %vm63 = vcmask 138240
  %v64 = vsel %vm63, %v58, %v60
  %v65 = vsel %vm63, %v60, %v62
  %v68 = vsel %vm47, %v64, 0.0
  %v69 = vsel %vm48, %v65, 0.0
  %70 = vst [vmem:[#allocation3] sm:$0xff] %v68
  %71 = vst [vmem:[#allocation3 + $0x8] sm:$0xff] %v69
  %v72 = vld [vmem:[#allocation2] sm:$0xff]
  %v73 = vld [vmem:[#allocation2 + $0x8] sm:$0xff]
  %v74 = vld [vmem:[#allocation2 + $0x10] sm:$0xff]
  %78 = vrot.lane.b32.xlu0 %v72, 16
  %v79 = vpop.permute.xlu0 %78
  %80 = vrot.lane.b32.xlu0 %v73, 16
  %v81 = vpop.permute.xlu0 %80
  %82 = vrot.lane.b32.xlu0 %v74, 16
  %v83 = vpop.permute.xlu0 %82
  %vm84 = vcmask 130048
  %v85 = vsel %vm84, %v79, %v81
  %v86 = vsel %vm84, %v81, %v83
  %89 = vst [vmem:[#allocation3 + $0x10] sm:$0xff] %v85
  %90 = vst [vmem:[#allocation3 + $0x18] sm:$0xff] %v86
  %v91 = vld [vmem:[#allocation2] sm:$0xff]
  %v92 = vld [vmem:[#allocation2 + $0x8] sm:$0xff]
  %v93 = vld [vmem:[#allocation2 + $0x10] sm:$0xff]
  %97 = vrot.lane.b32.xlu0 %v91, 15
  %v98 = vpop.permute.xlu0 %97
  %99 = vrot.lane.b32.xlu0 %v92, 15
  %v100 = vpop.permute.xlu0 %99
  %101 = vrot.lane.b32.xlu0 %v93, 15
  %v102 = vpop.permute.xlu0 %101
  %vm103 = vcmask 121856
  %v104 = vsel %vm103, %v98, %v100
  %v105 = vsel %vm103, %v100, %v102
  %v108 = vsel %vm49, %v104, 0.0
  %v109 = vsel %vm50, %v105, 0.0
  %110 = vst [vmem:[#allocation3 + $0x20] sm:$0xff] %v108
  %111 = vst [vmem:[#allocation3 + $0x28] sm:$0xff] %v109
  %v112 = vld [vmem:[#allocation2] sm:$0xff]
  %v113 = vld [vmem:[#allocation2 + $0x8] sm:$0xff]
  %v114 = vld [vmem:[#allocation2 + $0x10] sm:$0xff]
  %118 = vrot.lane.b32.xlu0 %v112, 1
  %v119 = vpop.permute.xlu0 %118
  %120 = vrot.lane.b32.xlu0 %v113, 1
  %v121 = vpop.permute.xlu0 %120
  %122 = vrot.lane.b32.xlu0 %v114, 1
  %v123 = vpop.permute.xlu0 %122
  %vm124 = vcmask 7168
  %v125 = vsel %vm124, %v119, %v121
  %v126 = vsel %vm124, %v121, %v123
  %v129 = vsel %vm47, %v125, 0.0
  %v130 = vsel %vm48, %v126, 0.0
  %131 = vst [vmem:[#allocation3 + $0x30] sm:$0xff] %v129
  %132 = vst [vmem:[#allocation3 + $0x38] sm:$0xff] %v130
  %v133 = vld [vmem:[#allocation2 + $0x8] sm:$0xff]
  %v134 = vld [vmem:[#allocation2 + $0x10] sm:$0xff]
  %135 = vst [vmem:[#allocation3 + $0x40] sm:$0xff] %v133
  %136 = vst [vmem:[#allocation3 + $0x48] sm:$0xff] %v134
  %v137 = vld [vmem:[#allocation2 + $0x8] sm:$0xff]
  %v138 = vld [vmem:[#allocation2 + $0x10] sm:$0xff]
  %v139 = vld [vmem:[#allocation2 + $0x18] sm:$0xff]
  %143 = vrot.lane.b32.xlu0 %v137, 127
  %v144 = vpop.permute.xlu0 %143
  %145 = vrot.lane.b32.xlu0 %v138, 127
  %v146 = vpop.permute.xlu0 %145
  %147 = vrot.lane.b32.xlu0 %v139, 127
  %v148 = vpop.permute.xlu0 %147
  %vm149 = vcmask 1039360
  %v150 = vsel %vm149, %v144, %v146
  %v151 = vsel %vm149, %v146, %v148
  %v154 = vsel %vm49, %v150, 0.0
  %v155 = vsel %vm50, %v151, 0.0
  %156 = vst [vmem:[#allocation3 + $0x50] sm:$0xff] %v154
  %157 = vst [vmem:[#allocation3 + $0x58] sm:$0xff] %v155
  %v158 = vld [vmem:[#allocation2 + $0x8] sm:$0xff]
  %v159 = vld [vmem:[#allocation2 + $0x10] sm:$0xff]
  %v160 = vld [vmem:[#allocation2 + $0x18] sm:$0xff]
  %164 = vrot.lane.b32.xlu0 %v158, 113
  %v165 = vpop.permute.xlu0 %164
  %166 = vrot.lane.b32.xlu0 %v159, 113
  %v167 = vpop.permute.xlu0 %166
  %168 = vrot.lane.b32.xlu0 %v160, 113
  %v169 = vpop.permute.xlu0 %168
  %vm170 = vcmask 924672
  %v171 = vsel %vm170, %v165, %v167
  %v172 = vsel %vm170, %v167, %v169
  %v175 = vsel %vm47, %v171, 0.0
  %v176 = vsel %vm48, %v172, 0.0
  %177 = vst [vmem:[#allocation3 + $0x60] sm:$0xff] %v175
  %178 = vst [vmem:[#allocation3 + $0x68] sm:$0xff] %v176
  %v179 = vld [vmem:[#allocation2 + $0x8] sm:$0xff]
  %v180 = vld [vmem:[#allocation2 + $0x10] sm:$0xff]
  %v181 = vld [vmem:[#allocation2 + $0x18] sm:$0xff]
  %185 = vrot.lane.b32.xlu0 %v179, 112
  %v186 = vpop.permute.xlu0 %185
  %187 = vrot.lane.b32.xlu0 %v180, 112
  %v188 = vpop.permute.xlu0 %187
  %189 = vrot.lane.b32.xlu0 %v181, 112
  %v190 = vpop.permute.xlu0 %189
  %vm191 = vcmask 916480
  %v192 = vsel %vm191, %v186, %v188
  %v193 = vsel %vm191, %v188, %v190
  %196 = vst [vmem:[#allocation3 + $0x70] sm:$0xff] %v192
  %197 = vst [vmem:[#allocation3 + $0x78] sm:$0xff] %v193
  %v198 = vld [vmem:[#allocation2 + $0x8] sm:$0xff]
  %v199 = vld [vmem:[#allocation2 + $0x10] sm:$0xff]
  %v200 = vld [vmem:[#allocation2 + $0x18] sm:$0xff]
  %204 = vrot.lane.b32.xlu0 %v198, 111
  %v205 = vpop.permute.xlu0 %204
  %206 = vrot.lane.b32.xlu0 %v199, 111
  %v207 = vpop.permute.xlu0 %206
  %208 = vrot.lane.b32.xlu0 %v200, 111
  %v209 = vpop.permute.xlu0 %208
  %vm210 = vcmask 908288
  %v211 = vsel %vm210, %v205, %v207
  %v212 = vsel %vm210, %v207, %v209
  %v215 = vsel %vm49, %v211, 0.0
  %v216 = vsel %vm50, %v212, 0.0
  %217 = vst [vmem:[#allocation3 + $0x80] sm:$0xff] %v215
  %218 = vst [vmem:[#allocation3 + $0x88] sm:$0xff] %v216
  %219 = vst [vmem:[#allocation3 + $0x90] sm:$0xff] 1.0
  %220 = vst [vmem:[#allocation3 + $0x98] sm:$0xff] 1.0
  %221 = vst [vmem:[#allocation3 + $0xa0] sm:$0xff] 0.0
  %222 = vst [vmem:[#allocation3 + $0xa8] sm:$0xff] 0.0
  %223 = vst [vmem:[#allocation3 + $0xb0] sm:$0xff] 0.0
  %224 = vst [vmem:[#allocation3 + $0xb8] sm:$0xff] 0.0
  %225 = vst [vmem:[#allocation3 + $0xc0] sm:$0xff] 0.0
  %226 = vst [vmem:[#allocation3 + $0xc8] sm:$0xff] 0.0
  %227 = vst [vmem:[#allocation3 + $0xd0] sm:$0xff] 0.0
  %228 = vst [vmem:[#allocation3 + $0xd8] sm:$0xff] 0.0
  %229 = vst [vmem:[#allocation3 + $0xe0] sm:$0xff] 0.0
  %230 = vst [vmem:[#allocation3 + $0xe8] sm:$0xff] 0.0
  %231 = vst [vmem:[#allocation3 + $0xf0] sm:$0xff] 0.0
  %232 = vst [vmem:[#allocation3 + $0xf8] sm:$0xff] 0.0
  %v233 = vld [vmem:[%s1] sm:$0xff]
  %v234 = vld [vmem:[%s1 + $0x8] sm:$0xff]
  %v235 = vld [vmem:[#allocation3] sm:$0xff]
  %v236 = vld [vmem:[#allocation3 + $0x8] sm:$0xff]
  %v237 = vld [vmem:[#allocation3 + $0x10] sm:$0xff]
  %v238 = vld [vmem:[#allocation3 + $0x18] sm:$0xff]
  %v239 = vld [vmem:[#allocation3 + $0x20] sm:$0xff]
  %v240 = vld [vmem:[#allocation3 + $0x28] sm:$0xff]
  %v241 = vld [vmem:[#allocation3 + $0x30] sm:$0xff]
  %v242 = vld [vmem:[#allocation3 + $0x38] sm:$0xff]
  %v243 = vld [vmem:[#allocation3 + $0x40] sm:$0xff]
  %v244 = vld [vmem:[#allocation3 + $0x48] sm:$0xff]
  %v245 = vld [vmem:[#allocation3 + $0x50] sm:$0xff]
  %v246 = vld [vmem:[#allocation3 + $0x58] sm:$0xff]
  %v247 = vld [vmem:[#allocation3 + $0x60] sm:$0xff]
  %v248 = vld [vmem:[#allocation3 + $0x68] sm:$0xff]
  %v249 = vld [vmem:[#allocation3 + $0x70] sm:$0xff]
  %v250 = vld [vmem:[#allocation3 + $0x78] sm:$0xff]
  %v251 = vld [vmem:[#allocation3 + $0x80] sm:$0xff]
  %v252 = vld [vmem:[#allocation3 + $0x88] sm:$0xff]
  %v253 = vld [vmem:[#allocation3 + $0x90] sm:$0xff]
  %v254 = vld [vmem:[#allocation3 + $0x98] sm:$0xff]
  %v255 = vld [vmem:[#allocation3 + $0xa0] sm:$0xff]
  %v256 = vld [vmem:[#allocation3 + $0xa8] sm:$0xff]
  %v257 = vld [vmem:[#allocation3 + $0xb0] sm:$0xff]
  %v258 = vld [vmem:[#allocation3 + $0xb8] sm:$0xff]
  %v259 = vld [vmem:[#allocation3 + $0xc0] sm:$0xff]
  %v260 = vld [vmem:[#allocation3 + $0xc8] sm:$0xff]
  %v261 = vld [vmem:[#allocation3 + $0xd0] sm:$0xff]
  %v262 = vld [vmem:[#allocation3 + $0xd8] sm:$0xff]
  %v263 = vld [vmem:[#allocation3 + $0xe0] sm:$0xff]
  %v264 = vld [vmem:[#allocation3 + $0xe8] sm:$0xff]
  %v265 = vld [vmem:[#allocation3 + $0xf0] sm:$0xff]
  %v266 = vld [vmem:[#allocation3 + $0xf8] sm:$0xff]
  %267 = vmatprep.subr.mxu0 %v236
  %268 = vmatpush1.msra.mxu0 %v235
  %269 = vmatprep.subr.mxu0 %v238
  %270 = vmatpush1.msra.mxu0 %v237
  %271 = vmatprep.subr.mxu0 %v240
  %272 = vmatpush1.msra.mxu0 %v239
  %273 = vmatprep.subr.mxu0 %v242
  %274 = vmatpush1.msra.mxu0 %v241
  %275 = vmatprep.subr.mxu0 %v244
  %276 = vmatpush1.msra.mxu0 %v243
  %277 = vmatprep.subr.mxu0 %v246
  %278 = vmatpush1.msra.mxu0 %v245
  %279 = vmatprep.subr.mxu0 %v248
  %280 = vmatpush1.msra.mxu0 %v247
  %281 = vmatprep.subr.mxu0 %v250
  %282 = vmatpush1.msra.mxu0 %v249
  %283 = vmatprep.subr.mxu0 %v252
  %284 = vmatpush1.msra.mxu0 %v251
  %285 = vmatprep.subr.mxu0 %v254
  %286 = vmatpush1.msra.mxu0 %v253
  %287 = vmatprep.subr.mxu0 %v256
  %288 = vmatpush1.msra.mxu0 %v255
  %289 = vmatprep.subr.mxu0 %v258
  %290 = vmatpush1.msra.mxu0 %v257
  %291 = vmatprep.subr.mxu0 %v260
  %292 = vmatpush1.msra.mxu0 %v259
  %293 = vmatprep.subr.mxu0 %v262
  %294 = vmatpush1.msra.mxu0 %v261
  %295 = vmatprep.subr.mxu0 %v264
  %296 = vmatpush1.msra.mxu0 %v263
  %297 = vmatprep.subr.mxu0 %v266
  %298 = vmatpush1.msra.mxu0 %v265
  %299 = vmatprep.subr.mxu0 0.0
  %300 = vmatpush1.msra.mxu0 0.0
  %301 = vmatprep.subr.mxu0 0.0
  %302 = vmatpush1.msra.mxu0 0.0
  %303 = vmatprep.subr.mxu0 0.0
  %304 = vmatpush1.msra.mxu0 0.0
  %305 = vmatprep.subr.mxu0 0.0
  %306 = vmatpush1.msra.mxu0 0.0
  %307 = vmatprep.subr.mxu0 0.0
  %308 = vmatpush1.msra.mxu0 0.0
  %309 = vmatprep.subr.mxu0 0.0
  %310 = vmatpush1.msra.mxu0 0.0
  %311 = vmatprep.subr.mxu0 0.0
  %312 = vmatpush1.msra.mxu0 0.0
  %313 = vmatprep.subr.mxu0 0.0
  %314 = vmatpush1.msra.mxu0 0.0
  %315 = vmatprep.subr.mxu0 0.0
  %316 = vmatpush1.msra.mxu0 0.0
  %317 = vmatprep.subr.mxu0 0.0
  %318 = vmatpush1.msra.mxu0 0.0
  %319 = vmatprep.subr.mxu0 0.0
  %320 = vmatpush1.msra.mxu0 0.0
  %321 = vmatprep.subr.mxu0 0.0
  %322 = vmatpush1.msra.mxu0 0.0
  %323 = vmatprep.subr.mxu0 0.0
  %324 = vmatpush1.msra.mxu0 0.0
  %325 = vmatprep.subr.mxu0 0.0
  %326 = vmatpush1.msra.mxu0 0.0
  %327 = vmatprep.subr.mxu0 0.0
  %328 = vmatpush1.msra.mxu0 0.0
  %329 = vmatprep.subr.mxu0 0.0
  %330 = vmatpush1.msra.mxu0 0.0
  %331 = vmatprep.mubr.f32.mxu0 0.0
  %332 = vmatmul.mubr.f32.gmra.mrb[0].mxu0 %v233
  %v333 = vpop.f32.mrb[0].mxu0
  %v334 = vadd.f32 0.0, %v333
  %v335 = vpop.f32.mrb[0].mxu0
  %v336 = vadd.f32 0.0, %v335
  %337 = vmatprep.mubr.f32.mxu0 0.0
  %338 = vmatmul.mubr.f32.gmra.mrb[0].mxu0 %v234
  %v339 = vpop.f32.mrb[0].mxu0
  %v340 = vadd.f32 0.0, %v339
  %v341 = vpop.f32.mrb[0].mxu0
  %v342 = vadd.f32 0.0, %v341
  %343 = vdwg.mxu0
  %v344 = vmax.f32 %v334, 0.0
  %v345 = vmax.f32 %v336, 0.0
  %v346 = vmax.f32 %v340, 0.0
  %v347 = vmax.f32 %v342, 0.0
  %v348 = vadd.f32 %v344, %v346
  %v349 = vadd.f32 %v345, %v347
  %v350 = vadd.f32 %v348, %v349
  %351 = vadd.xlane.f32.xlu0 %v350
  %v352 = vpop.xlane.xlu0 %351
  %v353 = vmul.f32 %v352, 0.00390625
  %v354 = vld [vmem:[%s2] sm:$0xf]
  %v355 = vld [vmem:[%s2 + $0x4] sm:$0x1]
  %v356 = vld [vmem:[%s2 + $0x5] sm:$0xf]
  %v357 = vld [vmem:[%s2 + $0x9] sm:$0xf]
  %v358 = vmul.f32 %v353, %v354
  %vm359 = vcmask 265216
  %v360 = vsel %vm359, %v358, 0.0
  %v361 = vrot.slane %v360, 4
  %v362 = vadd.f32 %v360, %v361
  %v363 = vrot.slane %v362, 2
  %v364 = vadd.f32 %v362, %v363
  %v365 = vrot.slane %v364, 1
  %v366 = vadd.f32 %v364, %v365
  %v367 = vadd.f32 %v366, %v355
  %v368 = vmax.f32 %v367, 0.0
  %v369 = vlaneseq
  %v370 = vshrl.u32 %v369, 7
  %v371 = vsub.s32 0, %v370
  %v372 = vrot.slane %v368, %v371
  %v373 = vmul.f32 %v356, %v372
  %v374 = vsel %vm359, %v373, 0.0
  %375 = vadd.xlane.f32.xlu0 %v374
  %v376 = vpop.xlane.xlu0 %375
  %v377 = vmul.f32 %v357, %v372
  %v378 = vsel %vm359, %v377, 0.0
  %379 = vadd.xlane.f32.xlu0 %v378
  %v380 = vpop.xlane.xlu0 %379
  %v381 = vmax.f32 %v376, %v380
  %v382 = vsub.f32 %v376, %v381
  %v383 = vmul.f32 %v382, 1.442695
  %v384 = vpow.pop %v383
  %v385 = vsub.f32 %v380, %v381
  %v386 = vmul.f32 %v385, 1.442695
  %v387 = vpow.pop %v386
  %v388 = vadd.f32 %v384, %v387
  %v389 = vrcp.pop %v388
  %v390 = vmul.f32 1.0, %v389
  %v391 = vmul.f32 %v384, %v390
  %v392 = vmul.f32 %v387, %v390
  %v394 = vrot.slane %v354, 4
  %v396 = vmul.f32 %v353, %v394
  %v398 = vrot.slane %v396, 4
  %v400 = vsel %vm359, %v398, 0.0
  %v401 = vrot.slane %v400, 4
  %v402 = vadd.f32 %v400, %v401
  %v403 = vrot.slane %v402, 2
  %v404 = vadd.f32 %v402, %v403
  %v405 = vrot.slane %v404, 1
  %v406 = vadd.f32 %v404, %v405
  %v407 = vadd.f32 %v406, %v355
  %v408 = vmax.f32 %v407, 0.0
  %v409 = vlaneseq
  %v410 = vshrl.u32 %v409, 7
  %v411 = vsub.s32 0, %v410
  %v412 = vrot.slane %v408, %v411
  %v413 = vmul.f32 %v356, %v412
  %v414 = vsel %vm359, %v413, 0.0
  %415 = vadd.xlane.f32.xlu0 %v414
  %v416 = vpop.xlane.xlu0 %415
  %v417 = vmul.f32 %v357, %v412
  %v418 = vsel %vm359, %v417, 0.0
  %419 = vadd.xlane.f32.xlu0 %v418
  %v420 = vpop.xlane.xlu0 %419
  %v421 = vmax.f32 %v416, %v420
  %v422 = vsub.f32 %v416, %v421
  %v423 = vmul.f32 %v422, 1.442695
  %v424 = vpow.pop %v423
  %v425 = vsub.f32 %v420, %v421
  %v426 = vmul.f32 %v425, 1.442695
  %v427 = vpow.pop %v426
  %v428 = vadd.f32 %v424, %v427
  %v429 = vrcp.pop %v428
  %v430 = vmul.f32 1.0, %v429
  %v431 = vmul.f32 %v424, %v430
  %v432 = vmul.f32 %v427, %v430
  %v434 = vrot.slane %v431, 4
  %vm436 = vcmask 1043456
  %v437 = vsel %vm436, %v391, %v434
  %v439 = vrot.slane %v432, 4
  %v441 = vsel %vm436, %v392, %v439
  %443 = vset.pattern.permute.xlu0 0
  %444 = vperm.xlu0 %443, %v437
  %v445 = vpop.permute.xlu0 %444
  %v447 = vmul.f32 %v445, %v344
  %v448 = vmul.f32 %v445, %v345
  %450 = vset.pattern.permute.xlu0 0
  %451 = vperm.xlu0 %450, %v441
  %v452 = vpop.permute.xlu0 %451
  %v454 = vmul.f32 %v452, %v346
  %v455 = vmul.f32 %v452, %v347
  %v456 = vadd.f32 %v447, %v454
  %v457 = vadd.f32 %v448, %v455
  %458 = vst [vmem:[%s3] sm:$0xff] %v456
  %459 = vst [vmem:[%s3 + $0x8] sm:$0xff] %v457
  // Predicated region
  $region14: #{isa_forward.1} parent=0 // pred_check
    _
  $region15: #{isa_forward.1} parent=0 // pred_check_branch
    %461 = sbr.rel (0) target = $region17
  $region16: #{isa_forward.1} parent=0 // pred_region
    _
  $region17: #{isa_forward.1} parent=0 // pred_fallthru
    _
  // Predicated region
  $region18: #{isa_forward.1} parent=0 // pred_check
    _
  $region19: #{isa_forward.1} parent=0 // pred_check_branch
    %463 = sbr.rel (0) target = $region21
  $region20: #{isa_forward.1} parent=0 // pred_region
    _
  $region21: #{isa_forward.1} parent=0 // pred_fallthru
    _

</llo_original>
